<compile_context>
chip_gen: v5e
topology: v5e:2x2
jax: 0.10.0
libtpu: 0.0.40
codegen_flags: <defaults>
</compile_context>

<pallas_src>
import math

import jax
import jax.numpy as jnp
from jax.experimental import pallas as pl
from jax.experimental.pallas import tpu as pltpu

LANE = 128        # vreg lane width (last dim)
BATCH_ALIGN = 16  # bf16 packs 2 rows per f32 sublane -> align batch tiles to 16


def _round_up(n, m):
    return ((n + m - 1) // m) * m


def fcn_kernel(x_ref, w1_ref, b1_ref, w2_ref, b2_ref, w3_ref, b3_ref, o_ref):
    # Layer 1: bf16 MXU operands, f32 accumulation, f32 bias + ReLU.
    h = jnp.dot(x_ref[...], w1_ref[...], preferred_element_type=jnp.float32)
    h = jnp.maximum(h + b1_ref[...], 0.0)

    # Layer 2: Linear + ReLU.
    h = jnp.dot(h.astype(jnp.bfloat16), w2_ref[...],
                preferred_element_type=jnp.float32)
    h = jnp.maximum(h + b2_ref[...], 0.0)

    # Layer 3 (final): Linear, no non-linearity.
    h = jnp.dot(h.astype(jnp.bfloat16), w3_ref[...],
                preferred_element_type=jnp.float32)
    o_ref[...] = (h + b3_ref[...]).astype(o_ref.dtype)


def fcn_forward(x, params, *, max_tile_batch=512):
    """x: [batch, state_dim] float32. params: list of (W, b) with W [in, out]."""
    (w1, b1), (w2, b2), (w3, b3) = params
    batch, in_dim = x.shape
    d1, d2, out_dim = w1.shape[1], w2.shape[1], w3.shape[1]

    # --- batch tile: aligned, capped, and (when the batch allows it) giving at
    # least two grid steps so both v7x TensorCores get work. ------------------
    batch_aligned = _round_up(max(batch, 1), BATCH_ALIGN)
    tb = min(_round_up(max_tile_batch, BATCH_ALIGN),
             _round_up(pl.cdiv(batch_aligned, 2), BATCH_ALIGN))
    padded_batch = _round_up(batch, tb)
    grid = (padded_batch // tb,)

    # --- streamed / resident operands (no feature-dim padding) ---------------
    xb = x.astype(jnp.bfloat16)
    if padded_batch != batch:                      # batch-only pad, <= tb-1 rows
        xb = jnp.pad(xb, ((0, padded_batch - batch), (0, 0)))
    w1b, w2b, w3b = (w.astype(jnp.bfloat16) for w in (w1, w2, w3))

    # Weights/biases: full blocks, same block index every grid step -> DMA'd
    # once, VMEM-resident across all batch tiles.
    def resident(a):
        return pl.BlockSpec(a.shape, lambda i: (0, 0))

    # --- VMEM budget derived from the actual footprint -----------------------
    BF16, F32 = 2, 4
    io_bytes = 2 * tb * in_dim * BF16 + 2 * tb * out_dim * F32   # dbl-buffered x / y
    weight_bytes = 2 * (w1b.size + w2b.size + w3b.size) * BF16 \
                 + 2 * (b1.size + b2.size + b3.size) * F32
    act_bytes = 4 * tb * max(d1, d2) * F32                        # in-kernel temporaries
    vmem_limit = min(io_bytes + weight_bytes + act_bytes + (8 << 20),
                     48 << 20)                                     # headroom under v7x 64 MiB

    out_padded = pl.pallas_call(
        fcn_kernel,
        out_shape=jax.ShapeDtypeStruct((padded_batch, out_dim), jnp.float32),
        grid=grid,
        in_specs=[
            pl.BlockSpec((tb, in_dim), lambda i: (i, 0)),   # x: batch-tiled, true width
            resident(w1b), resident(b1),
            resident(w2b), resident(b2),
            resident(w3b), resident(b3),
        ],
        out_specs=pl.BlockSpec((tb, out_dim), lambda i: (i, 0)),
        compiler_params=pltpu.CompilerParams(
            dimension_semantics=("parallel",),              # shard batch tiles across TCs
            vmem_limit_bytes=vmem_limit,
        ),
    )(xb, w1b, b1, w2b, b2, w3b, b3)

    return out_padded if padded_batch == batch else out_padded[:batch]


def init_params(key, dims):
    """Deterministic init mirroring layer_init(w_scale=sqrt(2)):
    weights ~ N(0, 1) * sqrt(2) / sqrt(fan_in), biases = 0."""
    params = []
    for i in range(len(dims) - 1):
        fan_in, fan_out = dims[i], dims[i + 1]
        key, sub = jax.random.split(key)
        w = jax.random.normal(sub, (fan_in, fan_out), dtype=jnp.float32)
        w = w * (math.sqrt(2.0) / math.sqrt(fan_in))
        b = jnp.zeros((1, fan_out), dtype=jnp.float32)
        params.append((w, b))
    return params


def reference_forward(x, params):
    h = x
    n = len(params)
    for i, (w, b) in enumerate(params):
        h = h @ w + b
        if i != n - 1:  # last layer has no non-linearity
            h = jnp.maximum(h, 0.0)
    return h


# TODO(synk): BatchNorm/LayerNorm/Dropout string-configured layers ('BN...',
# 'LN...', '_DP...') are not exercised here (dropout=0.0, plain int hidden dims).

if __name__ == "__main__":
    state_dim = 32
    hidden_units = [64, 64, 16]
    dims = [state_dim] + hidden_units

    key = jax.random.PRNGKey(0)
    key, xkey = jax.random.split(key)
    params = init_params(key, dims)

    # Small test (batch=2, like the module's toy usage).
    x = jax.random.normal(xkey, (2, state_dim), dtype=jnp.float32)
    out = jax.block_until_ready(fcn_forward(x, params))
    ref = reference_forward(x, params)
    assert out.shape == (2, hidden_units[-1])
    # bf16 MXU operands (f32 accumulation) -> relaxed tolerance.
    assert jnp.allclose(out, ref, atol=3e-2, rtol=3e-2), "mismatch vs reference (small)"

    # Multi-tile test: batch not a multiple of the tile, exercising the batch
    # grid + batch-only padding/slicing path.
    key, xkey2 = jax.random.split(key)
    x2 = jax.random.normal(xkey2, (40, state_dim), dtype=jnp.float32)
    out2 = jax.block_until_ready(fcn_forward(x2, params, max_tile_batch=16))
    ref2 = reference_forward(x2, params)
    assert out2.shape == (40, hidden_units[-1])
    assert jnp.allclose(out2, ref2, atol=3e-2, rtol=3e-2), "mismatch vs reference (tiled)"

    print("KERNEL_OK")
</pallas_src>

<mosaic_0001>
module attributes {stable_mosaic.version = 11 : i64} {
  func.func @fcn_kernel(%arg0: i32, %arg1: memref<16x32xbf16, #tpu.memory_space<vmem>>, %arg2: memref<32x64xbf16, #tpu.memory_space<vmem>>, %arg3: memref<1x64xf32, #tpu.memory_space<vmem>>, %arg4: memref<64x64xbf16, #tpu.memory_space<vmem>>, %arg5: memref<1x64xf32, #tpu.memory_space<vmem>>, %arg6: memref<64x16xbf16, #tpu.memory_space<vmem>>, %arg7: memref<1x16xf32, #tpu.memory_space<vmem>>, %arg8: memref<16x16xf32, #tpu.memory_space<vmem>>) attributes {dimension_semantics = [#tpu.dimension_semantics<parallel>], iteration_bounds = array<i64: 1>, scalar_prefetch = 0 : i64, scratch_operands = 0 : i64, tpu.core_type = #tpu.core_type<tc>, window_params = [{transform_indices = @transform_0, window_bounds = array<i64: 16, 32>}, {pipeline_mode = #tpu.pipeline_mode<synchronous>, transform_indices = @transform_1, window_bounds = array<i64: 32, 64>}, {pipeline_mode = #tpu.pipeline_mode<synchronous>, transform_indices = @transform_2, window_bounds = array<i64: 1, 64>}, {pipeline_mode = #tpu.pipeline_mode<synchronous>, transform_indices = @transform_3, window_bounds = array<i64: 64, 64>}, {pipeline_mode = #tpu.pipeline_mode<synchronous>, transform_indices = @transform_4, window_bounds = array<i64: 1, 64>}, {pipeline_mode = #tpu.pipeline_mode<synchronous>, transform_indices = @transform_5, window_bounds = array<i64: 64, 16>}, {pipeline_mode = #tpu.pipeline_mode<synchronous>, transform_indices = @transform_6, window_bounds = array<i64: 1, 16>}, {transform_indices = @transform_7, window_bounds = array<i64: 16, 16>}]} {
    %c0 = arith.constant 0 : index
    %c0_0 = arith.constant 0 : index
    %0 = vector.load %arg1[%c0, %c0_0] : memref<16x32xbf16, #tpu.memory_space<vmem>>, vector<16x32xbf16>
    %c0_1 = arith.constant 0 : index
    %c0_2 = arith.constant 0 : index
    %1 = vector.load %arg2[%c0_1, %c0_2] : memref<32x64xbf16, #tpu.memory_space<vmem>>, vector<32x64xbf16>
    %cst = arith.constant dense<0.000000e+00> : vector<16x64xf32>
    %2 = tpu.matmul %0, %1, %cst {dimension_numbers = #tpu.dot_dimension_numbers<[1], [0], [0], [1], [0, 0, 1, 1], [], []>} : vector<16x32xbf16>, vector<32x64xbf16>, vector<16x64xf32> -> vector<16x64xf32>
    %c0_3 = arith.constant 0 : index
    %c0_4 = arith.constant 0 : index
    %3 = vector.load %arg3[%c0_3, %c0_4] : memref<1x64xf32, #tpu.memory_space<vmem>>, vector<1x64xf32>
    %4 = vector.broadcast %3 : vector<1x64xf32> to vector<16x64xf32>
    %5 = arith.addf %2, %4 : vector<16x64xf32>
    %cst_5 = arith.constant 0.000000e+00 : f32
    %6 = vector.broadcast %cst_5 : f32 to vector<16x64xf32>
    %7 = arith.maximumf %5, %6 : vector<16x64xf32>
    %8 = arith.truncf %7 : vector<16x64xf32> to vector<16x64xbf16>
    %c0_6 = arith.constant 0 : index
    %c0_7 = arith.constant 0 : index
    %9 = vector.load %arg4[%c0_6, %c0_7] : memref<64x64xbf16, #tpu.memory_space<vmem>>, vector<64x64xbf16>
    %cst_8 = arith.constant dense<0.000000e+00> : vector<16x64xf32>
    %10 = tpu.matmul %8, %9, %cst_8 {dimension_numbers = #tpu.dot_dimension_numbers<[1], [0], [0], [1], [0, 0, 1, 1], [], []>} : vector<16x64xbf16>, vector<64x64xbf16>, vector<16x64xf32> -> vector<16x64xf32>
    %c0_9 = arith.constant 0 : index
    %c0_10 = arith.constant 0 : index
    %11 = vector.load %arg5[%c0_9, %c0_10] : memref<1x64xf32, #tpu.memory_space<vmem>>, vector<1x64xf32>
    %12 = vector.broadcast %11 : vector<1x64xf32> to vector<16x64xf32>
    %13 = arith.addf %10, %12 : vector<16x64xf32>
    %cst_11 = arith.constant 0.000000e+00 : f32
    %14 = vector.broadcast %cst_11 : f32 to vector<16x64xf32>
    %15 = arith.maximumf %13, %14 : vector<16x64xf32>
    %16 = arith.truncf %15 : vector<16x64xf32> to vector<16x64xbf16>
    %c0_12 = arith.constant 0 : index
    %c0_13 = arith.constant 0 : index
    %17 = vector.load %arg6[%c0_12, %c0_13] : memref<64x16xbf16, #tpu.memory_space<vmem>>, vector<64x16xbf16>
    %cst_14 = arith.constant dense<0.000000e+00> : vector<16x16xf32>
    %18 = tpu.matmul %16, %17, %cst_14 {dimension_numbers = #tpu.dot_dimension_numbers<[1], [0], [0], [1], [0, 0, 1, 1], [], []>} : vector<16x64xbf16>, vector<64x16xbf16>, vector<16x16xf32> -> vector<16x16xf32>
    %c0_15 = arith.constant 0 : index
    %c0_16 = arith.constant 0 : index
    %19 = vector.load %arg7[%c0_15, %c0_16] : memref<1x16xf32, #tpu.memory_space<vmem>>, vector<1x16xf32>
    %20 = vector.broadcast %19 : vector<1x16xf32> to vector<16x16xf32>
    %21 = arith.addf %18, %20 : vector<16x16xf32>
    %c0_17 = arith.constant 0 : index
    %c0_18 = arith.constant 0 : index
    %22 = vector.load %arg8[%c0_17, %c0_18] : memref<16x16xf32, #tpu.memory_space<vmem>>, vector<16x16xf32>
    tpu.vector_store %arg8[%c0_17, %c0_18], %21 {strides = array<i32>} : memref<16x16xf32, #tpu.memory_space<vmem>>, vector<16x16xf32>,
    return
  }
  func.func @transform_0(%arg0: i32) -> (i32, i32) {
    %c0_i32 = arith.constant 0 : i32
    %c0_i32_0 = arith.constant 0 : i32
    return %arg0, %c0_i32 : i32, i32
  }
  func.func @transform_1(%arg0: i32) -> (i32, i32) {
    %c0_i32 = arith.constant 0 : i32
    %c0_i32_0 = arith.constant 0 : i32
    %c0_i32_1 = arith.constant 0 : i32
    return %c0_i32, %c0_i32_0 : i32, i32
  }
  func.func @transform_2(%arg0: i32) -> (i32, i32) {
    %c0_i32 = arith.constant 0 : i32
    %c0_i32_0 = arith.constant 0 : i32
    %c0_i32_1 = arith.constant 0 : i32
    return %c0_i32, %c0_i32_0 : i32, i32
  }
  func.func @transform_3(%arg0: i32) -> (i32, i32) {
    %c0_i32 = arith.constant 0 : i32
    %c0_i32_0 = arith.constant 0 : i32
    %c0_i32_1 = arith.constant 0 : i32
    return %c0_i32, %c0_i32_0 : i32, i32
  }
  func.func @transform_4(%arg0: i32) -> (i32, i32) {
    %c0_i32 = arith.constant 0 : i32
    %c0_i32_0 = arith.constant 0 : i32
    %c0_i32_1 = arith.constant 0 : i32
    return %c0_i32, %c0_i32_0 : i32, i32
  }
  func.func @transform_5(%arg0: i32) -> (i32, i32) {
    %c0_i32 = arith.constant 0 : i32
    %c0_i32_0 = arith.constant 0 : i32
    %c0_i32_1 = arith.constant 0 : i32
    return %c0_i32, %c0_i32_0 : i32, i32
  }
  func.func @transform_6(%arg0: i32) -> (i32, i32) {
    %c0_i32 = arith.constant 0 : i32
    %c0_i32_0 = arith.constant 0 : i32
    %c0_i32_1 = arith.constant 0 : i32
    return %c0_i32, %c0_i32_0 : i32, i32
  }
  func.func @transform_7(%arg0: i32) -> (i32, i32) {
    %c0_i32 = arith.constant 0 : i32
    %c0_i32_0 = arith.constant 0 : i32
    return %arg0, %c0_i32 : i32, i32
  }
}

</mosaic_0001>

<llo_original>
// kernel: tpu_custom_call.1
$region0: #{tpu_custom_call.1}
  #allocation0 [shape = 'u32[]', space=smem, size = 0x4, offset = 0x4, fixed_abs, tag = 'smem constant byte address 0x4 - core index']
  #allocation1 [shape = 'u32[72,128]{1,0:T(1,128)}', space=vmem, size = 0x9000, scoped, tag = 'internal scratch']
  %s0 = inlined_call_operand.vmem [shape: bf16[16,32], index: 0, kind: input, shape index: {}]
  %s1 = inlined_call_operand.hbm [shape: bf16[32,64], index: 1, kind: input, shape index: {}]
  %s2 = inlined_call_operand.vmem [shape: f32[1,64], index: 2, kind: input, shape index: {}]
  %s3 = inlined_call_operand.vmem [shape: bf16[64,64], index: 3, kind: input, shape index: {}]
  %s4 = inlined_call_operand.vmem [shape: f32[1,64], index: 4, kind: input, shape index: {}]
  %s5 = inlined_call_operand.vmem [shape: bf16[64,16], index: 5, kind: input, shape index: {}]
  %s6 = inlined_call_operand.vmem [shape: f32[1,16], index: 6, kind: input, shape index: {}]
  %s7 = inlined_call_operand.hbm [shape: f32[16,16], index: 7, kind: output, shape index: {}]
  %s8 = sld [smem:[#allocation0]]
  $region42: #{tpu_custom_call.1} parent=0
    _
  %s10 = ssub.s32 1, %s8
  %s11 = scalar_select 0, %s10, %s8
  $region1: #{tpu_custom_call.1} parent=0
    #allocation2 [shape = 'u8[8192]{0}', space=vmem, size = 0x2000, scoped, tag = 'input window, operand 1, single buffered']
    #allocation3 [shape = 's32[1]{0}', space=sflag, size = 0x4, scoped, tag = 'scoped memory for tpu_custom_call.1']
    #allocation4 [shape = 's32[1]{0}', space=sflag, size = 0x4, scoped, tag = 'scoped memory for tpu_custom_call.1']
    #allocation5 [shape = 'u8[8192]{0}', space=vmem, size = 0x2000, scoped, tag = 'output window, operand 0, single buffered']
    %12 = vsyncpa [#allocation3], 0
    %13 = vsyncpa [#allocation4], 0
    // Predicated region
    $region2: #{tpu_custom_call.1} parent=1 // pred_check
      _
    $region3: #{tpu_custom_call.1} parent=1 // pred_check_branch
      %15 = sbr.rel (0) target = $region5
    $region4: #{tpu_custom_call.1} parent=1 // pred_region
      _
    $region5: #{tpu_custom_call.1} parent=1 // pred_fallthru
      _
    // Predicated region
    $region6: #{tpu_custom_call.1} parent=1 // pred_check
      _
    $region7: #{tpu_custom_call.1} parent=1 // pred_check_branch
      %17 = sbr.rel (0) target = $region9
    $region8: #{tpu_custom_call.1} parent=1 // pred_region
      %19 = vsyncadd [#allocation3], 0
      %s20 = sshll.u32 %s1, 4
      %s21 = int_to_ptr.hbm [resolvable:$true] %s20
      %s22 = sshll.u32 [#allocation2], 4
      %s23 = int_to_ptr.vmem [resolvable:$true] %s22
      %28 = dma.hbm_to_vmem [thread:$0]  %s21, 256, %s23, [#allocation3], 64, 64, 4
    $region9: #{tpu_custom_call.1} parent=1 // pred_fallthru
      _
    // Predicated region
    $region10: #{tpu_custom_call.1} parent=1 // pred_check
      _
    $region11: #{tpu_custom_call.1} parent=1 // pred_check_branch
      %30 = sbr.rel (0) target = $region13
    $region12: #{tpu_custom_call.1} parent=1 // pred_region
      _
    $region13: #{tpu_custom_call.1} parent=1 // pred_fallthru
      _
    // Predicated region
    $region14: #{tpu_custom_call.1} parent=1 // pred_check
      _
    $region15: #{tpu_custom_call.1} parent=1 // pred_check_branch
      %32 = sbr.rel (0) target = $region17
    $region16: #{tpu_custom_call.1} parent=1 // pred_region
      _
    $region17: #{tpu_custom_call.1} parent=1 // pred_fallthru
      _
    // Predicated region
    $region18: #{tpu_custom_call.1} parent=1 // pred_check
      _
    $region19: #{tpu_custom_call.1} parent=1 // pred_check_branch
      %34 = sbr.rel (0) target = $region21
    $region20: #{tpu_custom_call.1} parent=1 // pred_region
      _
    $region21: #{tpu_custom_call.1} parent=1 // pred_fallthru
      _
    // Predicated region
    $region22: #{tpu_custom_call.1} parent=1 // pred_check
      _
    $region23: #{tpu_custom_call.1} parent=1 // pred_check_branch
      %36 = sbr.rel (0) target = $region25
    $region24: #{tpu_custom_call.1} parent=1 // pred_region
      _
    $region25: #{tpu_custom_call.1} parent=1 // pred_fallthru
      _
    // Predicated region
    $region26: #{tpu_custom_call.1} parent=1 // pred_check
      _
    $region27: #{tpu_custom_call.1} parent=1 // pred_check_branch
      %38 = sbr.rel (0) target = $region29
    $region28: #{tpu_custom_call.1} parent=1 // pred_region
      _
    $region29: #{tpu_custom_call.1} parent=1 // pred_fallthru
      _
    // Predicated region
    $region30: #{tpu_custom_call.1} parent=1 // pred_check
      _
    $region31: #{tpu_custom_call.1} parent=1 // pred_check_branch
      %40 = sbr.rel (0) target = $region33
    $region32: #{tpu_custom_call.1} parent=1 // pred_region
      %42 = dma.done [#allocation3], 256
    $region33: #{tpu_custom_call.1} parent=1 // pred_fallthru
      _
    %v44 = vld [vmem:[%s0] sm:$0xf]
    %v45 = vld [vmem:[%s0 + $0x4] sm:$0xf]
    %v46 = vld [vmem:[#allocation2] sm:$0xf]
    %v47 = vld [vmem:[#allocation2 + $0x4] sm:$0xf]
    %v48 = vld [vmem:[#allocation2 + $0x8] sm:$0xf]
    %v49 = vld [vmem:[#allocation2 + $0xc] sm:$0xf]
    %v50 = vld [vmem:[%s2] sm:$0x1]
    %v52 = vperm.slane %v50, 0
    %v56 = vunpack.c.l.b16 %v44
    %v57 = vunpack.c.l.b16 %v45
    %v58 = vpack.c.b16 %v57, %v56
    %v63 = vunpack.c.l.b16 %v46
    %v64 = vunpack.c.l.b16 %v47
    %v65 = vunpack.c.l.b16 %v48
    %v66 = vunpack.c.l.b16 %v49
    %v67 = vpack.c.b16 %v64, %v63
    %v68 = vpack.c.b16 %v66, %v65
    %vm71 = vcmask 261120
    %v73 = vsel %vm71, %v58, 0
    %75 = vmatpush.bf16.msra.mxu0 0
    %76 = vmatpush.bf16.msra.mxu0 0
    %77 = vmatpush.bf16.msra.mxu0 0
    %78 = vmatpush.bf16.msra.mxu0 0
    %79 = vmatpush.bf16.msra.mxu0 0
    %80 = vmatpush.bf16.msra.mxu0 0
    %81 = vmatpush.bf16.msra.mxu0 %v68
    %82 = vmatpush.bf16.msra.mxu0 %v67
    %83 = vmatmul.bf16.gmra.mxu0 %v73
    %v84 = vpop.f32.mrf.mxu0
    %v85 = vadd.f32 %v52, %v84
    %v86 = vpop.f32.mrf.mxu0
    %v87 = vadd.f32 %v52, %v86
    %88 = vdwg.mxu0
    %v89 = vmax.f32 %v85, 0.0
    %v90 = vmax.f32 %v87, 0.0
    %v91 = vpack.c.bf16 %v90, %v89
    %v92 = vld [vmem:[%s3] sm:$0xf]
    %v93 = vld [vmem:[%s3 + $0x4] sm:$0xf]
    %v94 = vld [vmem:[%s3 + $0x8] sm:$0xf]
    %v95 = vld [vmem:[%s3 + $0xc] sm:$0xf]
    %v96 = vld [vmem:[%s3 + $0x10] sm:$0xf]
    %v97 = vld [vmem:[%s3 + $0x14] sm:$0xf]
    %v98 = vld [vmem:[%s3 + $0x18] sm:$0xf]
    %v99 = vld [vmem:[%s3 + $0x1c] sm:$0xf]
    %v100 = vld [vmem:[%s4] sm:$0x1]
    %v102 = vperm.slane %v100, 0
    %v112 = vunpack.c.l.b16 %v92
    %v113 = vunpack.c.l.b16 %v93
    %v114 = vunpack.c.l.b16 %v94
    %v115 = vunpack.c.l.b16 %v95
    %v116 = vunpack.c.l.b16 %v96
    %v117 = vunpack.c.l.b16 %v97
    %v118 = vunpack.c.l.b16 %v98
    %v119 = vunpack.c.l.b16 %v99
    %v120 = vpack.c.b16 %v113, %v112
    %v121 = vpack.c.b16 %v115, %v114
    %v122 = vpack.c.b16 %v117, %v116
    %v123 = vpack.c.b16 %v119, %v118
    %vm128 = vcmask 523264
    %v130 = vsel %vm128, %v91, 0
    %132 = vmatpush.bf16.msra.mxu0 0
    %133 = vmatpush.bf16.msra.mxu0 0
    %134 = vmatpush.bf16.msra.mxu0 0
    %135 = vmatpush.bf16.msra.mxu0 0
    %136 = vmatpush.bf16.msra.mxu0 %v123
    %137 = vmatpush.bf16.msra.mxu0 %v122
    %138 = vmatpush.bf16.msra.mxu0 %v121
    %139 = vmatpush.bf16.msra.mxu0 %v120
    %140 = vmatmul.bf16.gmra.mxu0 %v130
    %v141 = vpop.f32.mrf.mxu0
    %v142 = vadd.f32 %v102, %v141
    %v143 = vpop.f32.mrf.mxu0
    %v144 = vadd.f32 %v102, %v143
    %145 = vdwg.mxu0
    %v146 = vmax.f32 %v142, 0.0
    %v147 = vmax.f32 %v144, 0.0
    %v148 = vpack.c.bf16 %v147, %v146
    %v149 = vld [vmem:[%s5] sm:$0xf]
    %v150 = vld [vmem:[%s5 + $0x4] sm:$0xf]
    %v151 = vld [vmem:[%s5 + $0x8] sm:$0xf]
    %v152 = vld [vmem:[%s5 + $0xc] sm:$0xf]
    %v153 = vld [vmem:[%s5 + $0x10] sm:$0xf]
    %v154 = vld [vmem:[%s5 + $0x14] sm:$0xf]
    %v155 = vld [vmem:[%s5 + $0x18] sm:$0xf]
    %v156 = vld [vmem:[%s5 + $0x1c] sm:$0xf]
    %v157 = vld [vmem:[%s6] sm:$0x1]
    %v159 = vperm.slane %v157, 0
    %v169 = vunpack.c.l.b16 %v149
    %v170 = vunpack.c.l.b16 %v150
    %v171 = vunpack.c.l.b16 %v151
    %v172 = vunpack.c.l.b16 %v152
    %v173 = vunpack.c.l.b16 %v153
    %v174 = vunpack.c.l.b16 %v154
    %v175 = vunpack.c.l.b16 %v155
    %v176 = vunpack.c.l.b16 %v156
    %v177 = vpack.c.b16 %v170, %v169
    %v178 = vpack.c.b16 %v172, %v171
    %v179 = vpack.c.b16 %v174, %v173
    %v180 = vpack.c.b16 %v176, %v175
    %v186 = vsel %vm128, %v148, 0
    %188 = vmatpush.bf16.msra.mxu0 0
    %189 = vmatpush.bf16.msra.mxu0 0
    %190 = vmatpush.bf16.msra.mxu0 0
    %191 = vmatpush.bf16.msra.mxu0 0
    %192 = vmatpush.bf16.msra.mxu0 %v180
    %193 = vmatpush.bf16.msra.mxu0 %v179
    %194 = vmatpush.bf16.msra.mxu0 %v178
    %195 = vmatpush.bf16.msra.mxu0 %v177
    %196 = vmatmul.bf16.gmra.mxu0 %v186
    %v197 = vpop.f32.mrf.mxu0
    %v198 = vadd.f32 %v159, %v197
    %v199 = vpop.f32.mrf.mxu0
    %v200 = vadd.f32 %v159, %v199
    %201 = vdwg.mxu0
    %vm202 = vcmask 130048
    %203 = vst.msk [vmem:[#allocation5] sm:$0xff] %vm202, %v198
    %204 = vst.msk [vmem:[#allocation5 + $0x8] sm:$0xff] %vm202, %v200
    // Predicated region
    $region34: #{tpu_custom_call.1} parent=1 // pred_check
      _
    $region35: #{tpu_custom_call.1} parent=1 // pred_check_branch
      %206 = sbr.rel (0) target = $region37
    $region36: #{tpu_custom_call.1} parent=1 // pred_region
      %208 = vsyncadd [#allocation4], 0
      %s209 = sshll.u32 [#allocation5], 4
      %s210 = int_to_ptr.vmem [resolvable:$true] %s209
      %s211 = sshll.u32 %s7, 4
      %s212 = int_to_ptr.hbm [resolvable:$true] %s211
      %217 = dma.vmem_to_hbm [thread:$0]  %s210, 256, %s212, [#allocation4], 128, 128, 8
    $region37: #{tpu_custom_call.1} parent=1 // pred_fallthru
      _
    // Predicated region
    $region38: #{tpu_custom_call.1} parent=1 // pred_check
      _
    $region39: #{tpu_custom_call.1} parent=1 // pred_check_branch
      %219 = sbr.rel (0) target = $region41
    $region40: #{tpu_custom_call.1} parent=1 // pred_region
      %221 = dma.done [#allocation4], 256
    $region41: #{tpu_custom_call.1} parent=1 // pred_fallthru
      _
    %222 = vsyncpa [#allocation3], 1
    %223 = vsyncpa [#allocation4], 1

</llo_original>
